<compile_context>
chip_gen: v7x
topology: tpu7x:2x2x1
jax: 0.10.0
libtpu: 0.0.40
codegen_flags: <defaults>
</compile_context>

<pallas_src>
import functools

import jax
import jax.numpy as jnp
from jax.experimental import pallas as pl
from jax.experimental.pallas import tpu as pltpu


def _round_up(a: int, b: int) -> int:
    return (a + b - 1) // b * b


def _ls_ce_kernel(x_ref, t_ref, out_ref, *, smoothing: float, n_valid: int,
                  c_valid: int, tn: int):
    """Partial (per row-tile) sum of the label-smoothing CE loss.

    loss_row = confidence*(m + lse - x[t]) + smoothing*(m + lse - mean(x))
             = (m + lse) - confidence*x[t] - smoothing*mean(x)
    """
    confidence = 1.0 - smoothing

    x = x_ref[...].astype(jnp.float32)            # (TN, Cp) -- compute in f32
    t = t_ref[...]                                # (TN, 1) int32
    tn_rows, cp = x.shape

    col = jax.lax.broadcasted_iota(jnp.int32, (tn_rows, cp), 1)

    # Mask padded class lanes out of the max / exp-sum (wrapper zero-pads x).
    if cp != c_valid:
        x_lse = jnp.where(col < c_valid, x, -jnp.inf)
    else:
        x_lse = x

    m = jnp.max(x_lse, axis=-1, keepdims=True)                              # (TN, 1)
    lse = jnp.log(jnp.sum(jnp.exp(x_lse - m), axis=-1, keepdims=True))      # (TN, 1)

    # gather x[row, target[row]] via one-hot select (no dynamic gather on TPU)
    x_t = jnp.sum(jnp.where(col == t, x, 0.0), axis=-1, keepdims=True)      # (TN, 1)

    # Zero-padded class lanes contribute 0, so a plain row sum equals the true sum.
    sum_x = jnp.sum(x, axis=-1, keepdims=True)                              # (TN, 1)

    loss = (m + lse) - confidence * x_t - smoothing * (sum_x / c_valid)     # (TN, 1)

    # Mask rows that are batch padding.
    row = (jax.lax.broadcasted_iota(jnp.int32, (tn_rows, 1), 0)
           + pl.program_id(0) * tn)
    loss = jnp.where(row < n_valid, loss, 0.0)

    # Lane/sublane-dense partial-sum store; wrapper reduces element [0, 0].
    out_ref[...] = jnp.full(out_ref.shape, jnp.sum(loss), dtype=jnp.float32)


def label_smoothing_cross_entropy(x: jax.Array, target: jax.Array,
                                  smoothing: float = 0.1) -> jax.Array:
    """x: (N, C) float logits (f32 or bf16); target: (N,) int class ids. Scalar loss."""
    assert smoothing < 1.0
    n, c = x.shape
    sub = 16 if x.dtype == jnp.bfloat16 else 8
    cp = _round_up(c, 128)

    # Row tile sized to ~4 MiB of f32-equivalent logits: fits double-buffered plus
    # f32 temporaries inside the 32 MiB scoped VMEM default on v5e/v6e/v7x.
    budget_rows = ((4 << 20) // (cp * 4)) // sub * sub
    tn = max(sub, min(budget_rows, _round_up(n, sub)))
    n_pad = _round_up(n, tn)
    grid = n_pad // tn
    # TODO(synk): for LLM-vocab C (>=64K) add a second "arbitrary" grid axis over C
    # with an online (running max + rescaled exp-sum) LSE accumulator.

    x_p = x
    if (n_pad, cp) != (n, c):
        x_p = jnp.pad(x, ((0, n_pad - n), (0, cp - c)))     # zero padding
    t_p = target.astype(jnp.int32)
    if n_pad != n:
        t_p = jnp.pad(t_p, (0, n_pad - n))
    t2d = t_p.reshape(n_pad, 1)

    cost = pl.CostEstimate(
        flops=6 * n * c,
        transcendentals=n * c + n,
        bytes_accessed=n_pad * cp * x.dtype.itemsize + n_pad * 4 + grid * 8 * 128 * 4,
    )

    partials = pl.pallas_call(
        functools.partial(_ls_ce_kernel, smoothing=float(smoothing),
                          n_valid=n, c_valid=c, tn=tn),
        out_shape=jax.ShapeDtypeStruct((grid, 8, 128), jnp.float32),
        grid=(grid,),
        in_specs=[
            pl.BlockSpec((tn, cp), lambda i: (i, 0)),
            pl.BlockSpec((tn, 1), lambda i: (i, 0)),
        ],
        out_specs=pl.BlockSpec((1, 8, 128), lambda i: (i, 0, 0)),
        compiler_params=pltpu.CompilerParams(
            dimension_semantics=("parallel",),
            vmem_limit_bytes=32 * 1024 * 1024,
        ),
        cost_estimate=cost,
    )(x_p, t2d)

    # Per-tile partial sums; mean over the TRUE batch size.
    return jnp.sum(partials[:, 0, 0]) / n


def _reference(x, target, smoothing=0.1):
    confidence = 1.0 - smoothing
    logprobs = jax.nn.log_softmax(x.astype(jnp.float32), axis=-1)
    nll = -jnp.take_along_axis(logprobs, target[:, None], axis=-1)[:, 0]
    smooth = -jnp.mean(logprobs, axis=-1)
    return jnp.mean(confidence * nll + smoothing * smooth)


if __name__ == "__main__":
    key = jax.random.PRNGKey(0)
    kx, kt = jax.random.split(key)

    # Small f32 case (C padded 32 -> 128 lanes in the wrapper).
    N, C = 8, 32
    x = jax.random.normal(kx, (N, C), dtype=jnp.float32)
    target = jax.random.randint(kt, (N,), 0, C, dtype=jnp.int32)
    loss = jax.block_until_ready(label_smoothing_cross_entropy(x, target, 0.1))
    ref = _reference(x, target, 0.1)
    assert jnp.allclose(loss, ref, atol=1e-5, rtol=1e-5), (loss, ref)

    # Unaligned N and C exercise row + class padding / masking.
    kx2, kt2 = jax.random.split(kt)
    N2, C2 = 10, 200
    x2 = jax.random.normal(kx2, (N2, C2), dtype=jnp.float32)
    t2 = jax.random.randint(kt2, (N2,), 0, C2, dtype=jnp.int32)
    loss2 = jax.block_until_ready(label_smoothing_cross_entropy(x2, t2, 0.1))
    ref2 = _reference(x2, t2, 0.1)
    assert jnp.allclose(loss2, ref2, atol=1e-5, rtol=1e-5), (loss2, ref2)

    # bf16 logits stream at half the HBM bytes; in-kernel math stays f32.
    x3 = x.astype(jnp.bfloat16)
    loss3 = jax.block_until_ready(label_smoothing_cross_entropy(x3, target, 0.1))
    ref3 = _reference(x3, target, 0.1)
    assert jnp.allclose(loss3, ref3, atol=1e-3, rtol=1e-3), (loss3, ref3)

    print("KERNEL_OK")
</pallas_src>

<mosaic_0001>
module attributes {stable_mosaic.version = 11 : i64} {
  func.func @_ls_ce_kernel(%arg0: i32, %arg1: memref<8x128xf32, #tpu.memory_space<vmem>>, %arg2: memref<8x1xi32, #tpu.memory_space<vmem>>, %arg3: memref<1x8x128xf32, #tpu.memory_space<vmem>>) attributes {dimension_semantics = [#tpu.dimension_semantics<parallel>], iteration_bounds = array<i64: 1>, scalar_prefetch = 0 : i64, scratch_operands = 0 : i64, tpu.core_type = #tpu.core_type<tc>, window_params = [{transform_indices = @transform_0, window_bounds = array<i64: 8, 128>}, {transform_indices = @transform_1, window_bounds = array<i64: 8, 1>}, {transform_indices = @transform_2, window_bounds = array<i64: 1, 8, 128>}]} {
    %c0 = arith.constant 0 : index
    %c0_0 = arith.constant 0 : index
    %0 = vector.load %arg1[%c0, %c0_0] : memref<8x128xf32, #tpu.memory_space<vmem>>, vector<8x128xf32>
    %c0_1 = arith.constant 0 : index
    %c0_2 = arith.constant 0 : index
    %1 = vector.load %arg2[%c0_1, %c0_2] : memref<8x1xi32, #tpu.memory_space<vmem>>, vector<8x1xi32>
    %2 = tpu.iota {dimensions = array<i32: 1>} : vector<8x128xi32>
    %c32_i32 = arith.constant 32 : i32
    %3 = vector.broadcast %c32_i32 : i32 to vector<8x128xi32>
    %4 = arith.cmpi slt, %2, %3 : vector<8x128xi32>
    %cst = arith.constant 0xFF800000 : f32
    %5 = vector.broadcast %cst : f32 to vector<8x128xf32>
    %6 = arith.select %4, %0, %5 : vector<8x128xi1>, vector<8x128xf32>
    %cst_3 = arith.constant dense<0xFF800000> : vector<8xf32>
    %7 = vector.multi_reduction <maximumf>, %6, %cst_3 [1] : vector<8x128xf32> to vector<8xf32>
    %8 = vector.shape_cast %7 : vector<8xf32> to vector<8x1xf32>
    %9 = vector.broadcast %8 : vector<8x1xf32> to vector<8x128xf32>
    %10 = arith.subf %6, %9 : vector<8x128xf32>
    %11 = math.exp %10 : vector<8x128xf32>
    %cst_4 = arith.constant dense<0.000000e+00> : vector<8xf32>
    %12 = vector.multi_reduction <add>, %11, %cst_4 [1] : vector<8x128xf32> to vector<8xf32>
    %13 = vector.shape_cast %12 : vector<8xf32> to vector<8x1xf32>
    %14 = math.log %13 : vector<8x1xf32>
    %15 = vector.broadcast %1 : vector<8x1xi32> to vector<8x128xi32>
    %16 = arith.cmpi eq, %2, %15 : vector<8x128xi32>
    %cst_5 = arith.constant 0.000000e+00 : f32
    %17 = vector.broadcast %cst_5 : f32 to vector<8x128xf32>
    %18 = arith.select %16, %0, %17 : vector<8x128xi1>, vector<8x128xf32>
    %cst_6 = arith.constant dense<0.000000e+00> : vector<8xf32>
    %19 = vector.multi_reduction <add>, %18, %cst_6 [1] : vector<8x128xf32> to vector<8xf32>
    %20 = vector.shape_cast %19 : vector<8xf32> to vector<8x1xf32>
    %cst_7 = arith.constant dense<0.000000e+00> : vector<8xf32>
    %21 = vector.multi_reduction <add>, %0, %cst_7 [1] : vector<8x128xf32> to vector<8xf32>
    %22 = vector.shape_cast %21 : vector<8xf32> to vector<8x1xf32>
    %23 = arith.addf %8, %14 : vector<8x1xf32>
    %cst_8 = arith.constant 0.899999976 : f32
    %24 = vector.broadcast %cst_8 : f32 to vector<8x1xf32>
    %25 = arith.mulf %24, %20 : vector<8x1xf32>
    %26 = arith.subf %23, %25 : vector<8x1xf32>
    %cst_9 = arith.constant 3.200000e+01 : f32
    %27 = vector.broadcast %cst_9 : f32 to vector<8x1xf32>
    %28 = arith.divf %22, %27 : vector<8x1xf32>
    %cst_10 = arith.constant 1.000000e-01 : f32
    %29 = vector.broadcast %cst_10 : f32 to vector<8x1xf32>
    %30 = arith.mulf %29, %28 : vector<8x1xf32>
    %31 = arith.subf %26, %30 : vector<8x1xf32>
    %32 = tpu.iota {dimensions = array<i32: 0>} : vector<8x1xi32>
    %c8_i32 = arith.constant 8 : i32
    %33 = arith.muli %arg0, %c8_i32 : i32
    %34 = vector.broadcast %33 : i32 to vector<8x1xi32>
    %35 = arith.addi %32, %34 : vector<8x1xi32>
    %c8_i32_11 = arith.constant 8 : i32
    %36 = vector.broadcast %c8_i32_11 : i32 to vector<8x1xi32>
    %37 = arith.cmpi slt, %35, %36 : vector<8x1xi32>
    %cst_12 = arith.constant 0.000000e+00 : f32
    %38 = vector.broadcast %cst_12 : f32 to vector<8x1xf32>
    %39 = arith.select %37, %31, %38 : vector<8x1xi1>, vector<8x1xf32>
    %40 = vector.shape_cast %39 : vector<8x1xf32> to vector<1x8x1xf32>
    %cst_13 = arith.constant dense<0.000000e+00> : vector<1xf32>
    %41 = vector.multi_reduction <add>, %40, %cst_13 [1, 2] : vector<1x8x1xf32> to vector<1xf32>
    %42 = vector.shape_cast %41 : vector<1xf32> to vector<1x1x1xf32>
    %43 = vector.extract %42[0, 0, 0] : f32 from vector<1x1x1xf32>
    %44 = vector.broadcast %43 : f32 to vector<1x8x128xf32>
    %c0_14 = arith.constant 0 : index
    %c0_15 = arith.constant 0 : index
    %c0_16 = arith.constant 0 : index
    %45 = vector.load %arg3[%c0_14, %c0_15, %c0_16] : memref<1x8x128xf32, #tpu.memory_space<vmem>>, vector<1x8x128xf32>
    tpu.vector_store %arg3[%c0_14, %c0_15, %c0_16], %44 {strides = array<i32>} : memref<1x8x128xf32, #tpu.memory_space<vmem>>, vector<1x8x128xf32>,
    return
  }
  func.func @transform_0(%arg0: i32) -> (i32, i32) {
    %c0_i32 = arith.constant 0 : i32
    %c0_i32_0 = arith.constant 0 : i32
    return %arg0, %c0_i32 : i32, i32
  }
  func.func @transform_1(%arg0: i32) -> (i32, i32) {
    %c0_i32 = arith.constant 0 : i32
    %c0_i32_0 = arith.constant 0 : i32
    return %arg0, %c0_i32 : i32, i32
  }
  func.func @transform_2(%arg0: i32) -> (i32, i32, i32) {
    %c0_i32 = arith.constant 0 : i32
    %c0_i32_0 = arith.constant 0 : i32
    %c0_i32_1 = arith.constant 0 : i32
    return %arg0, %c0_i32, %c0_i32_0 : i32, i32, i32
  }
}

</mosaic_0001>

<llo_original>
// kernel: tpu_custom_call.1
$region0: #{tpu_custom_call.1}
  #allocation0 [shape = 'u32[]', space=smem, size = 0x4, offset = 0x4, fixed_abs, tag = 'smem constant byte address 0x4 - core index']
  #allocation1 [shape = 'u32[144,128]{1,0:T(1,128)}', space=vmem, size = 0x12000, scoped, tag = 'internal scratch']
  %s0 = inlined_call_operand.vmem [shape: f32[8,128], index: 0, kind: input, shape index: {}]
  %s1 = inlined_call_operand.vmem [shape: s32[8,1], index: 1, kind: input, shape index: {}]
  %s2 = inlined_call_operand.hbm [shape: f32[1,8,128], index: 2, kind: output, shape index: {}]
  %s3 = sld [smem:[#allocation0]]
  $region18: #{tpu_custom_call.1} parent=0
    _
  %s5 = ssub.s32 1, %s3
  %s6 = scalar_select 0, %s5, %s3
  $region1: #{tpu_custom_call.1} parent=0
    #allocation2 [shape = 'u8[4096]{0}', space=vmem, size = 0x1000, scoped, tag = 'output window, operand 0, single buffered']
    #allocation3 [shape = 's32[1]{0}', space=sflag, size = 0x4, scoped, tag = 'scoped memory for tpu_custom_call.1']
    %7 = vsyncpa [#allocation3], 0
    // Predicated region
    $region2: #{tpu_custom_call.1} parent=1 // pred_check
      _
    $region3: #{tpu_custom_call.1} parent=1 // pred_check_branch
      %9 = sbr.rel (0) target = $region5
    $region4: #{tpu_custom_call.1} parent=1 // pred_region
      _
    $region5: #{tpu_custom_call.1} parent=1 // pred_fallthru
      _
    // Predicated region
    $region6: #{tpu_custom_call.1} parent=1 // pred_check
      _
    $region7: #{tpu_custom_call.1} parent=1 // pred_check_branch
      %11 = sbr.rel (0) target = $region9
    $region8: #{tpu_custom_call.1} parent=1 // pred_region
      _
    $region9: #{tpu_custom_call.1} parent=1 // pred_fallthru
      _
    %v12 = vld [vmem:[%s0] sm:$0xff]
    %v13 = vld [vmem:[%s1] sm:$0xff]
    %v14 = vlaneseq
    %v15 = vand.u32 %v14, 127
    %vm16 = vcmp.lt.s32.totalorder %v15, 32
    %v17 = vsel %vm16, %v12, -inf
    %18 = vmax.xlane.f32.xlu0 %v17
    %v19 = vpop.xlane.xlu0 %18
    %v20 = vsub.f32 %v17, %v19
    %v21 = vmul.f32 %v20, 1.442695
    %v22 = vpow.pop %v21
    %23 = vadd.xlane.f32.xlu0 %v22
    %v24 = vpop.xlane.xlu0 %23
    %v25 = vlog2.pop %v24
    %v26 = vmul.f32 %v25, 0.6931472
    %27 = vset.pattern.permute.xlu0 0
    %28 = vperm.xlu0 %27, %v13
    %v29 = vpop.permute.xlu0 %28
    %vm30 = vcmp.eq.s32.totalorder %v15, %v29
    %v31 = vsel %vm30, %v12, 0.0
    %32 = vadd.xlane.f32.xlu0 %v31
    %v33 = vpop.xlane.xlu0 %32
    %34 = vadd.xlane.f32.xlu0 %v12
    %v35 = vpop.xlane.xlu0 %34
    %v36 = vadd.f32 %v19, %v26
    %v37 = vmul.f32 %v33, 0.9
    %v38 = vsub.f32 %v36, %v37
    %v39 = vrcp.pop 32.0
    %v40 = vmul.f32 %v35, %v39
    %v41 = vmul.f32 %v40, 0.1
    %v42 = vsub.f32 %v38, %v41
    %v43 = vlaneseq
    %v44 = vshrl.u32 %v43, 7
    %s45 = smul.u32 0, 8
    %v46 = vstv %s45
    %v47 = vadd.s32 %v44, %v46
    %vm48 = vcmp.lt.s32.totalorder %v47, 8
    %v49 = vsel %vm48, %v42, 0.0
    %vm50 = vcmask 7168
    %v51 = vsel %vm50, %v49, 0.0
    %52 = vadd.xlane.f32.xlu0 %v51
    %v53 = vpop.xlane.xlu0 %52
    %v54 = vrot.slane %v53, 4
    %v55 = vadd.f32 %v53, %v54
    %v56 = vrot.slane %v55, 2
    %v57 = vadd.f32 %v55, %v56
    %v58 = vrot.slane %v57, 1
    %v59 = vadd.f32 %v57, %v58
    %s60 = vtos %v59
    %v61 = vstv %s60
    %62 = vst [vmem:[#allocation2] sm:$0xff] %v61
    // Predicated region
    $region10: #{tpu_custom_call.1} parent=1 // pred_check
      _
    $region11: #{tpu_custom_call.1} parent=1 // pred_check_branch
      %64 = sbr.rel (0) target = $region13
    $region12: #{tpu_custom_call.1} parent=1 // pred_region
      %s66 = ssub.s32 128, 128
      %67 = vsyncadd [#allocation3], %s66
      %s69 = sshll.u32 [#allocation2], 4
      %s70 = int_to_ptr.vmem [resolvable:$true] %s69
      %72 = dma.vmem_to_hbm [thread:$0]  %s70, 128, %s2, [#allocation3]
    $region13: #{tpu_custom_call.1} parent=1 // pred_fallthru
      _
    // Predicated region
    $region14: #{tpu_custom_call.1} parent=1 // pred_check
      _
    $region15: #{tpu_custom_call.1} parent=1 // pred_check_branch
      %74 = sbr.rel (0) target = $region17
    $region16: #{tpu_custom_call.1} parent=1 // pred_region
      %75 = dma.done [#allocation3], 128
    $region17: #{tpu_custom_call.1} parent=1 // pred_fallthru
      _
    %76 = vsyncpa [#allocation3], 1

</llo_original>
